<compile_context>
chip_gen: v6e
topology: v6e:2x2x1
jax: 0.10.0
libtpu: 0.0.40
codegen_flags: <defaults>
</compile_context>

<pallas_src>
import jax
import jax.numpy as jnp
from jax import lax
from jax.experimental import pallas as pl
from jax.experimental.pallas import tpu as pltpu


def _cbow_kernel(idx_ref, emb_hbm_ref, out_ref, emb_vmem, copy_sem):
    """Fused CBOW tile kernel.

    idx_ref     : (TB*2C, lseq) int32 VMEM  -- context ids, (batch, slot)-major rows
    emb_hbm_ref : (V, D) float32 HBM (memory_space=pl.ANY) -- embedding table
    out_ref     : (TB*2C, D) float32 VMEM   -- sum over lseq of gathered embeddings
    emb_vmem    : (V, D) float32 VMEM scratch -- single resident copy of the table
    copy_sem    : DMA semaphore
    """
    # Copy the table HBM -> VMEM exactly once; scratch persists across grid steps
    # and the grid axis is "arbitrary" (sequential), so step 0 always runs first.
    @pl.when(pl.program_id(0) == 0)
    def _():
        cp = pltpu.make_async_copy(emb_hbm_ref, emb_vmem, copy_sem)
        cp.start()
        cp.wait()

    ids = idx_ref[...]                          # (M, L) int32, M = TB*2C
    m, l = ids.shape
    v = emb_vmem.shape[0]

    # One-hot counts for ALL slots / batch rows at once (single hoisted iota;
    # JAX does not CSE broadcast_in_dim, so no per-slot re-materialization).
    # counts[r, t] = number of sequence positions in row r whose context token is t.
    iota_v = lax.broadcasted_iota(jnp.int32, (m, l, v), 2)            # (M, L, V)
    onehot = (ids[:, :, None] == iota_v).astype(jnp.float32)          # (M, L, V)
    counts = jnp.sum(onehot, axis=1)                                  # (M, V)

    # Embedding gather + sum over lseq for every (batch, slot) row in ONE MXU
    # matmul.  Kept in f32 (counts are exact; bf16 table cast is gated on the
    # accuracy requirement, so not applied here).
    out_ref[...] = jnp.dot(counts, emb_vmem[...],
                           preferred_element_type=jnp.float32)        # (M, D)


def _build_context_indices(x, context_size):
    """Vectorized equivalent of the PyTorch nested loops (plain-JAX glue).

    Returns (nbatch, lseq, 2*context_size) int32 with the reference column order
    [before k=1..C, after k=1..C]; boundary positions use token id 0.
    """
    nbatch, lseq = x.shape
    x = x.astype(jnp.int32)
    j = jnp.arange(lseq)
    cols = []
    for k in range(1, context_size + 1):            # context_before
        pos = j - k
        safe = jnp.clip(pos, 0, lseq - 1)
        cols.append(jnp.where(pos >= 0, x[:, safe], 0))
    for k in range(1, context_size + 1):            # context_after
        pos = j + k
        safe = jnp.clip(pos, 0, lseq - 1)
        cols.append(jnp.where(pos < lseq, x[:, safe], 0))
    return jnp.stack(cols, axis=-1).astype(jnp.int32)   # (B, L, 2C)


def cbow_forward(x, emb_table, context_size, *, batch_tile=None):
    nbatch, lseq = x.shape
    vocab, dim = emb_table.shape
    two_c = 2 * context_size

    # Glue: build context ids, lay them out (batch, slot)-major so one batch tile
    # is a contiguous (TB*2C, lseq) row block.
    idx = _build_context_indices(x, context_size)       # (B, L, 2C)
    idx = jnp.transpose(idx, (0, 2, 1))                 # (B, 2C, L)

    # Batch tile: aim for ~256 fused matmul rows (fills the MXU, amortizes the
    # ~0.35 us per-grid-step overhead, unmasked 8+-sublane output stores).
    if batch_tile is None:
        target_rows = 256
        tb = max(1, min(nbatch, target_rows // two_c))
    else:
        tb = max(1, min(batch_tile, nbatch))
    # Keep the row block a multiple of 8 sublanes unless it spans the whole batch.
    while tb < nbatch and (tb * two_c) % 8 != 0:
        tb += 1

    n_tiles = pl.cdiv(nbatch, tb)
    nbatch_pad = n_tiles * tb
    if nbatch_pad != nbatch:
        idx = jnp.pad(idx, ((0, nbatch_pad - nbatch), (0, 0), (0, 0)))
    idx2d = idx.reshape(nbatch_pad * two_c, lseq)        # (rows_total, L)

    rows = tb * two_c
    out2d = pl.pallas_call(
        _cbow_kernel,
        out_shape=jax.ShapeDtypeStruct((nbatch_pad * two_c, dim), jnp.float32),
        grid=(n_tiles,),
        in_specs=[
            pl.BlockSpec((rows, lseq), lambda b: (b, 0)),   # context-id row tile
            pl.BlockSpec(memory_space=pl.ANY),              # table stays in HBM
        ],
        out_specs=pl.BlockSpec((rows, dim), lambda b: (b, 0)),
        scratch_shapes=[
            pltpu.VMEM((vocab, dim), jnp.float32),          # single-buffered table
            pltpu.SemaphoreType.DMA,
        ],
        compiler_params=pltpu.CompilerParams(
            # "arbitrary": the table is copied into scratch on grid step 0 and
            # reused, which requires sequential grid execution on one core.
            # TODO(synk): for v7x megacore, replicate the copy per core (or use
            # the DMA row-gather algorithm) and mark this axis "parallel".
            dimension_semantics=("arbitrary",),
            # Above v5e's 16 MiB scoped default; safe on v6e/v7x as well.
            vmem_limit_bytes=32 * 1024 * 1024,
        ),
    )(idx2d, emb_table)

    out = out2d.reshape(nbatch_pad, two_c, dim)
    return out[:nbatch]


if __name__ == "__main__":
    # Small shapes consistent with the module: CBOW(vocab_size=64,
    # embedding_size=128, context_size=2) applied to ids of shape (batch=2, seq=8).
    vocab_size, embedding_size, context_size = 64, 128, 2
    nbatch, lseq = 2, 8

    key = jax.random.PRNGKey(0)
    k_emb, k_x = jax.random.split(key)
    # torch.nn.Embedding default init is N(0, 1).
    emb_table = jax.random.normal(k_emb, (vocab_size, embedding_size), dtype=jnp.float32)
    x = jax.random.randint(k_x, (nbatch, lseq), 0, vocab_size, dtype=jnp.int32)

    out = jax.block_until_ready(cbow_forward(x, emb_table, context_size))

    # Pure-JAX reference of the torch semantics: embed (B, L, 2C) ids, sum over dim=1.
    idx_ref = _build_context_indices(x, context_size)          # (B, L, 2C)
    ref = jnp.sum(emb_table[idx_ref], axis=1)                  # (B, 2C, D)

    assert out.shape == (nbatch, 2 * context_size, embedding_size)
    assert out.dtype == jnp.float32
    assert jnp.allclose(out, ref, rtol=1e-5, atol=1e-5), "mismatch vs reference"
    print("KERNEL_OK")
</pallas_src>

<mosaic_0001>
module attributes {stable_mosaic.version = 11 : i64} {
  func.func @_cbow_kernel(%arg0: i32, %arg1: memref<8x8xi32, #tpu.memory_space<vmem>>, %arg2: memref<64x128xf32, #tpu.memory_space<any>>, %arg3: memref<8x128xf32, #tpu.memory_space<vmem>>, %arg4: memref<64x128xf32, #tpu.memory_space<vmem>>, %arg5: memref<!tpu.dma_semaphore, #tpu.memory_space<semaphore_mem>>) attributes {dimension_semantics = [#tpu.dimension_semantics<arbitrary>], iteration_bounds = array<i64: 1>, scalar_prefetch = 0 : i64, scratch_operands = 2 : i64, tpu.core_type = #tpu.core_type<tc>, window_params = [{transform_indices = @transform_0, window_bounds = array<i64: 8, 8>}, {}, {transform_indices = @transform_2, window_bounds = array<i64: 8, 128>}]} {
    %c0_i32 = arith.constant 0 : i32
    %0 = arith.cmpi eq, %arg0, %c0_i32 : i32
    %1 = arith.extui %0 : i1 to i32
    %c0_i32_0 = arith.constant 0 : i32
    %2 = arith.cmpi ne, %1, %c0_i32_0 : i32
    scf.if %2 {
      tpu.enqueue_dma source(%arg2 : memref<64x128xf32, #tpu.memory_space<any>>) target(%arg4 : memref<64x128xf32, #tpu.memory_space<vmem>>) target_semaphore(%arg5 : memref<!tpu.dma_semaphore, #tpu.memory_space<semaphore_mem>>)
      tpu.wait_dma2 semaphore(%arg5 : memref<!tpu.dma_semaphore, #tpu.memory_space<semaphore_mem>>) src(%arg2 : memref<64x128xf32, #tpu.memory_space<any>>) dst(%arg4 : memref<64x128xf32, #tpu.memory_space<vmem>>)
    } else {
    }
    %c0 = arith.constant 0 : index
    %c0_1 = arith.constant 0 : index
    %3 = vector.load %arg1[%c0, %c0_1] : memref<8x8xi32, #tpu.memory_space<vmem>>, vector<8x8xi32>
    %4 = tpu.iota {dimensions = array<i32: 2>} : vector<8x8x64xi32>
    %5 = vector.shape_cast %3 : vector<8x8xi32> to vector<8x8x1xi32>
    %6 = vector.broadcast %5 : vector<8x8x1xi32> to vector<8x8x64xi32>
    %7 = arith.cmpi eq, %6, %4 : vector<8x8x64xi32>
    %8 = arith.extui %7 : vector<8x8x64xi1> to vector<8x8x64xi32>
    %9 = arith.sitofp %8 : vector<8x8x64xi32> to vector<8x8x64xf32>
    %cst = arith.constant dense<0.000000e+00> : vector<8x64xf32>
    %10 = vector.multi_reduction <add>, %9, %cst [1] : vector<8x8x64xf32> to vector<8x64xf32>
    %c0_2 = arith.constant 0 : index
    %c0_3 = arith.constant 0 : index
    %11 = vector.load %arg4[%c0_2, %c0_3] : memref<64x128xf32, #tpu.memory_space<vmem>>, vector<64x128xf32>
    %cst_4 = arith.constant dense<0.000000e+00> : vector<8x128xf32>
    %12 = tpu.matmul %10, %11, %cst_4 {dimension_numbers = #tpu.dot_dimension_numbers<[1], [0], [0], [1], [0, 0, 1, 1], [], []>} : vector<8x64xf32>, vector<64x128xf32>, vector<8x128xf32> -> vector<8x128xf32>
    %c0_5 = arith.constant 0 : index
    %c0_6 = arith.constant 0 : index
    %13 = vector.load %arg3[%c0_5, %c0_6] : memref<8x128xf32, #tpu.memory_space<vmem>>, vector<8x128xf32>
    tpu.vector_store %arg3[%c0_5, %c0_6], %12 {strides = array<i32>} : memref<8x128xf32, #tpu.memory_space<vmem>>, vector<8x128xf32>,
    return
  }
  func.func @transform_0(%arg0: i32) -> (i32, i32) {
    %c0_i32 = arith.constant 0 : i32
    %c0_i32_0 = arith.constant 0 : i32
    return %arg0, %c0_i32 : i32, i32
  }
  func.func @transform_2(%arg0: i32) -> (i32, i32) {
    %c0_i32 = arith.constant 0 : i32
    %c0_i32_0 = arith.constant 0 : i32
    return %arg0, %c0_i32 : i32, i32
  }
}

</mosaic_0001>

<llo_original>
// kernel: tpu_custom_call.1
$region0: #{tpu_custom_call.1}
  #allocation0 [shape = 'u32[]', space=smem, size = 0x4, offset = 0x4, fixed_abs, tag = 'smem constant byte address 0x4 - core index']
  #allocation1 [shape = 'u32[144,128]{1,0:T(1,128)}', space=vmem, size = 0x12000, scoped, tag = 'internal scratch']
  #allocation2 [shape = 'f32[64,128]{1,0:T(8,128)}', space=vmem, size = 0x8000, scoped, tag = 'scratch operand']
  #allocation3 [shape = 's32[1]{0}', space=sflag, size = 0x4, scoped, tag = 'scratch operand']
  #allocation8 [shape = 's32[]', space=sflag, size = 0x4, offset = 0, fixed_abs, tag = 'sflag constant byte address 0x0 - dummy sync flag']
  #allocation9 [shape = 's32[]', space=sflag, size = 0x4, offset = 0, fixed_abs, tag = 'sflag constant byte address 0x0 - dummy sync flag']
  #allocation10 [shape = 'u32[]', space=smem, size = 0x4, offset = 0x44, fixed_abs, tag = 'smem constant byte address 0x44 - assertion arg 0']
  #allocation11 [shape = 'u32[]', space=smem, size = 0x4, offset = 0x48, fixed_abs, tag = 'smem constant byte address 0x48 - assertion arg 1']
  %s0 = inlined_call_operand.hbm [shape: s32[8,8], index: 0, kind: input, shape index: {}]
  %s1 = inlined_call_operand.hbm [shape: f32[64,128], index: 1, kind: input, shape index: {}]
  %s2 = inlined_call_operand.hbm [shape: f32[8,128], index: 2, kind: output, shape index: {}]
  %s3 = sld [smem:[#allocation0]]
  $region26: #{tpu_custom_call.1} parent=0
    _
  %s5 = ssub.s32 1, %s3
  %s6 = scalar_select 0, %s5, %s3
  $region1: #{tpu_custom_call.1} parent=0
    #allocation4 [shape = 'u8[4096]{0}', space=vmem, size = 0x1000, scoped, tag = 'input window, operand 0, single buffered']
    #allocation5 [shape = 's32[1]{0}', space=sflag, size = 0x4, scoped, tag = 'scoped memory for tpu_custom_call.1']
    #allocation6 [shape = 's32[1]{0}', space=sflag, size = 0x4, scoped, tag = 'scoped memory for tpu_custom_call.1']
    #allocation7 [shape = 'u8[4096]{0}', space=vmem, size = 0x1000, scoped, tag = 'output window, operand 0, single buffered']
    %7 = vsyncpa [#allocation5], 0
    %8 = vsyncpa [#allocation6], 0
    // Predicated region
    $region2: #{tpu_custom_call.1} parent=1 // pred_check
      _
    $region3: #{tpu_custom_call.1} parent=1 // pred_check_branch
      %10 = sbr.rel (0) target = $region5
    $region4: #{tpu_custom_call.1} parent=1 // pred_region
      %s12 = ssub.s32 128, 128
      %13 = vsyncadd [#allocation5], %s12
      %s15 = sshll.u32 [#allocation4], 4
      %s16 = int_to_ptr.vmem [resolvable:$true] %s15
      %18 = dma.hbm_to_vmem [thread:$0]  %s0, 128, %s16, [#allocation5]
    $region5: #{tpu_custom_call.1} parent=1 // pred_fallthru
      _
    // Predicated region
    $region6: #{tpu_custom_call.1} parent=1 // pred_check
      _
    $region7: #{tpu_custom_call.1} parent=1 // pred_check_branch
      %20 = sbr.rel (0) target = $region9
    $region8: #{tpu_custom_call.1} parent=1 // pred_region
      %21 = dma.done [#allocation5], 128
    $region9: #{tpu_custom_call.1} parent=1 // pred_fallthru
      _
    %p22 = scmp.eq.s32.totalorder 0, 0
    // Predicated region
    $region10: #{tpu_custom_call.1} parent=1 // pred_check
      %p23 = pneg %p22
    $region11: #{tpu_custom_call.1} parent=1 // pred_check_branch
      %25 = sbr.rel (%p23) target = $region13
    $region12: #{tpu_custom_call.1} parent=1 // pred_region
      // Predicated region
      $region14: #{tpu_custom_call.1} parent=12 // pred_check
        _
      $region15: #{tpu_custom_call.1} parent=12 // pred_check_branch
        %27 = sbr.rel target = $region17
      $region16: #{tpu_custom_call.1} parent=12 // pred_region
        %28 = sst [smem:[#allocation10]] [#allocation9]
        %29 = sst [smem:[#allocation11]] [#allocation8]
      $region17: #{tpu_custom_call.1} parent=12 // pred_fallthru
        _
      %31 = shalt.err (0)
      %s33 = sshll.u32 [#allocation2], 4
      %s34 = int_to_ptr.vmem [resolvable:$true] %s33
      %36 = dma.hbm_to_vmem [thread:$0]  %s1, 1024, %s34, [#allocation3]
      %s37 = smul.u32 64, 1
      %s38 = sshll.u32 %s37, 4
      %39 = dma.done [#allocation3], %s38
    $region13: #{tpu_custom_call.1} parent=1 // pred_fallthru
      _
    %v40 = vld [vmem:[#allocation4] sm:$0xff]
    %v41 = vlaneseq
    %v42 = vand.u32 %v41, 127
    %v43 = vlaneseq
    %v44 = vshrl.u32 %v43, 7
    %v45 = vsub.s32 0, %v44
    %v46 = vrot.slane %v40, %v45
    %48 = vbcast.lane.b32.xlu0 %v46, 256
    %v49 = vpop.permute.xlu0 %48
    %v50 = vlaneseq
    %v51 = vshrl.u32 %v50, 7
    %v52 = vsub.s32 1, %v51
    %v53 = vrot.slane %v40, %v52
    %55 = vbcast.lane.b32.xlu0 %v53, 256
    %v56 = vpop.permute.xlu0 %55
    %v57 = vlaneseq
    %v58 = vshrl.u32 %v57, 7
    %v59 = vsub.s32 2, %v58
    %v60 = vrot.slane %v40, %v59
    %62 = vbcast.lane.b32.xlu0 %v60, 256
    %v63 = vpop.permute.xlu0 %62
    %v64 = vlaneseq
    %v65 = vshrl.u32 %v64, 7
    %v66 = vsub.s32 3, %v65
    %v67 = vrot.slane %v40, %v66
    %69 = vbcast.lane.b32.xlu0 %v67, 256
    %v70 = vpop.permute.xlu0 %69
    %v71 = vlaneseq
    %v72 = vshrl.u32 %v71, 7
    %v73 = vsub.s32 4, %v72
    %v74 = vrot.slane %v40, %v73
    %76 = vbcast.lane.b32.xlu0 %v74, 256
    %v77 = vpop.permute.xlu0 %76
    %v78 = vlaneseq
    %v79 = vshrl.u32 %v78, 7
    %v80 = vsub.s32 5, %v79
    %v81 = vrot.slane %v40, %v80
    %83 = vbcast.lane.b32.xlu0 %v81, 256
    %v84 = vpop.permute.xlu0 %83
    %v85 = vlaneseq
    %v86 = vshrl.u32 %v85, 7
    %v87 = vsub.s32 6, %v86
    %v88 = vrot.slane %v40, %v87
    %90 = vbcast.lane.b32.xlu0 %v88, 256
    %v91 = vpop.permute.xlu0 %90
    %v92 = vlaneseq
    %v93 = vshrl.u32 %v92, 7
    %v94 = vsub.s32 7, %v93
    %v95 = vrot.slane %v40, %v94
    %97 = vbcast.lane.b32.xlu0 %v95, 256
    %v98 = vpop.permute.xlu0 %97
    %vm99 = vcmp.eq.s32.totalorder %v49, %v42
    %vm100 = vcmp.eq.s32.totalorder %v56, %v42
    %vm101 = vcmp.eq.s32.totalorder %v63, %v42
    %vm102 = vcmp.eq.s32.totalorder %v70, %v42
    %vm103 = vcmp.eq.s32.totalorder %v77, %v42
    %vm104 = vcmp.eq.s32.totalorder %v84, %v42
    %vm105 = vcmp.eq.s32.totalorder %v91, %v42
    %vm106 = vcmp.eq.s32.totalorder %v98, %v42
    %v107 = vsel %vm99, 1, 0
    %v108 = vsel %vm100, 1, 0
    %v109 = vsel %vm101, 1, 0
    %v110 = vsel %vm102, 1, 0
    %v111 = vsel %vm103, 1, 0
    %v112 = vsel %vm104, 1, 0
    %v113 = vsel %vm105, 1, 0
    %v114 = vsel %vm106, 1, 0
    %v115 = vcvt.s32.f32 %v107
    %v116 = vcvt.s32.f32 %v108
    %v117 = vcvt.s32.f32 %v109
    %v118 = vcvt.s32.f32 %v110
    %v119 = vcvt.s32.f32 %v111
    %v120 = vcvt.s32.f32 %v112
    %v121 = vcvt.s32.f32 %v113
    %v122 = vcvt.s32.f32 %v114
    %vm123 = vcmask 523264
    %v124 = vsel %vm123, %v115, 0.0
    %v125 = vrot.slane %v124, 4
    %v126 = vadd.f32 %v124, %v125
    %v127 = vrot.slane %v126, 2
    %v128 = vadd.f32 %v126, %v127
    %v129 = vrot.slane %v128, 1
    %v130 = vadd.f32 %v128, %v129
    %v131 = vsel %vm123, %v116, 0.0
    %v132 = vrot.slane %v131, 4
    %v133 = vadd.f32 %v131, %v132
    %v134 = vrot.slane %v133, 2
    %v135 = vadd.f32 %v133, %v134
    %v136 = vrot.slane %v135, 1
    %v137 = vadd.f32 %v135, %v136
    %v138 = vsel %vm123, %v117, 0.0
    %v139 = vrot.slane %v138, 4
    %v140 = vadd.f32 %v138, %v139
    %v141 = vrot.slane %v140, 2
    %v142 = vadd.f32 %v140, %v141
    %v143 = vrot.slane %v142, 1
    %v144 = vadd.f32 %v142, %v143
    %v145 = vsel %vm123, %v118, 0.0
    %v146 = vrot.slane %v145, 4
    %v147 = vadd.f32 %v145, %v146
    %v148 = vrot.slane %v147, 2
    %v149 = vadd.f32 %v147, %v148
    %v150 = vrot.slane %v149, 1
    %v151 = vadd.f32 %v149, %v150
    %v152 = vsel %vm123, %v119, 0.0
    %v153 = vrot.slane %v152, 4
    %v154 = vadd.f32 %v152, %v153
    %v155 = vrot.slane %v154, 2
    %v156 = vadd.f32 %v154, %v155
    %v157 = vrot.slane %v156, 1
    %v158 = vadd.f32 %v156, %v157
    %v159 = vsel %vm123, %v120, 0.0
    %v160 = vrot.slane %v159, 4
    %v161 = vadd.f32 %v159, %v160
    %v162 = vrot.slane %v161, 2
    %v163 = vadd.f32 %v161, %v162
    %v164 = vrot.slane %v163, 1
    %v165 = vadd.f32 %v163, %v164
    %v166 = vsel %vm123, %v121, 0.0
    %v167 = vrot.slane %v166, 4
    %v168 = vadd.f32 %v166, %v167
    %v169 = vrot.slane %v168, 2
    %v170 = vadd.f32 %v168, %v169
    %v171 = vrot.slane %v170, 1
    %v172 = vadd.f32 %v170, %v171
    %v173 = vsel %vm123, %v122, 0.0
    %v174 = vrot.slane %v173, 4
    %v175 = vadd.f32 %v173, %v174
    %v176 = vrot.slane %v175, 2
    %v177 = vadd.f32 %v175, %v176
    %v178 = vrot.slane %v177, 1
    %v179 = vadd.f32 %v177, %v178
    %v180 = vld [vmem:[#allocation2] sm:$0xff]
    %v181 = vld [vmem:[#allocation2 + $0x8] sm:$0xff]
    %v182 = vld [vmem:[#allocation2 + $0x10] sm:$0xff]
    %v183 = vld [vmem:[#allocation2 + $0x18] sm:$0xff]
    %v184 = vld [vmem:[#allocation2 + $0x20] sm:$0xff]
    %v185 = vld [vmem:[#allocation2 + $0x28] sm:$0xff]
    %v186 = vld [vmem:[#allocation2 + $0x30] sm:$0xff]
    %v187 = vld [vmem:[#allocation2 + $0x38] sm:$0xff]
    %vm196 = vcmask 1041409
    %v197 = vsel %vm196, %v137, %v130
    %vm198 = vcmask 1042434
    %v199 = vsel %vm198, %v144, %v197
    %vm200 = vcmask 1043459
    %v201 = vsel %vm200, %v151, %v199
    %vm202 = vcmask 1044484
    %v203 = vsel %vm202, %v158, %v201
    %vm204 = vcmask 1045509
    %v205 = vsel %vm204, %v165, %v203
    %vm206 = vcmask 1046534
    %v207 = vsel %vm206, %v172, %v205
    %vm208 = vcmask 1047559
    %v209 = vsel %vm208, %v179, %v207
    %v210 = vsel %vm123, %v209, 0
    %212 = vmatprep.subr.mxu0 0.0
    %213 = vmatpush1.msra.mxu0 0.0
    %214 = vmatprep.subr.mxu0 0.0
    %215 = vmatpush1.msra.mxu0 0.0
    %216 = vmatprep.subr.mxu0 0.0
    %217 = vmatpush1.msra.mxu0 0.0
    %218 = vmatprep.subr.mxu0 0.0
    %219 = vmatpush1.msra.mxu0 0.0
    %220 = vmatprep.subr.mxu0 0.0
    %221 = vmatpush1.msra.mxu0 0.0
    %222 = vmatprep.subr.mxu0 0.0
    %223 = vmatpush1.msra.mxu0 0.0
    %224 = vmatprep.subr.mxu0 0.0
    %225 = vmatpush1.msra.mxu0 0.0
    %226 = vmatprep.subr.mxu0 0.0
    %227 = vmatpush1.msra.mxu0 0.0
    %228 = vmatprep.subr.mxu0 0.0
    %229 = vmatpush1.msra.mxu0 %v187
    %230 = vmatprep.subr.mxu0 0.0
    %231 = vmatpush1.msra.mxu0 %v186
    %232 = vmatprep.subr.mxu0 0.0
    %233 = vmatpush1.msra.mxu0 %v185
    %234 = vmatprep.subr.mxu0 0.0
    %235 = vmatpush1.msra.mxu0 %v184
    %236 = vmatprep.subr.mxu0 0.0
    %237 = vmatpush1.msra.mxu0 %v183
    %238 = vmatprep.subr.mxu0 0.0
    %239 = vmatpush1.msra.mxu0 %v182
    %240 = vmatprep.subr.mxu0 0.0
    %241 = vmatpush1.msra.mxu0 %v181
    %242 = vmatprep.subr.mxu0 0.0
    %243 = vmatpush1.msra.mxu0 %v180
    %244 = vmatprep.subr.mxu0 0.0
    %245 = vmatpush2.msra.mxu0 0.0
    %246 = vmatprep.subr.mxu0 0.0
    %247 = vmatpush2.msra.mxu0 0.0
    %248 = vmatprep.subr.mxu0 0.0
    %249 = vmatpush2.msra.mxu0 0.0
    %250 = vmatprep.subr.mxu0 0.0
    %251 = vmatpush2.msra.mxu0 0.0
    %252 = vmatprep.subr.mxu0 0.0
    %253 = vmatpush2.msra.mxu0 0.0
    %254 = vmatprep.subr.mxu0 0.0
    %255 = vmatpush2.msra.mxu0 0.0
    %256 = vmatprep.subr.mxu0 0.0
    %257 = vmatpush2.msra.mxu0 0.0
    %258 = vmatprep.subr.mxu0 0.0
    %259 = vmatpush2.msra.mxu0 0.0
    %260 = vmatprep.subr.mxu0 0.0
    %261 = vmatpush2.msra.mxu0 0.0
    %262 = vmatprep.subr.mxu0 0.0
    %263 = vmatpush2.msra.mxu0 0.0
    %264 = vmatprep.subr.mxu0 0.0
    %265 = vmatpush2.msra.mxu0 0.0
    %266 = vmatprep.subr.mxu0 0.0
    %267 = vmatpush2.msra.mxu0 0.0
    %268 = vmatprep.subr.mxu0 0.0
    %269 = vmatpush2.msra.mxu0 0.0
    %270 = vmatprep.subr.mxu0 0.0
    %271 = vmatpush2.msra.mxu0 0.0
    %272 = vmatprep.subr.mxu0 0.0
    %273 = vmatpush2.msra.mxu0 0.0
    %274 = vmatprep.subr.mxu0 0.0
    %275 = vmatpush2.msra.mxu0 0.0
    %276 = vmatprep.mubr.f32.mxu0 0.0
    %277 = vmatmul.mubr.f32.gmra.mxu0 %v210
    %v278 = vpop.f32.mrf.mxu0
    %v279 = vadd.f32 0.0, %v278
    %v280 = vpop.f32.mrf.mxu0
    %281 = vdwg.mxu0
    %282 = vst [vmem:[#allocation7] sm:$0xff] %v279
    // Predicated region
    $region18: #{tpu_custom_call.1} parent=1 // pred_check
      _
    $region19: #{tpu_custom_call.1} parent=1 // pred_check_branch
      %284 = sbr.rel (0) target = $region21
    $region20: #{tpu_custom_call.1} parent=1 // pred_region
      %s286 = ssub.s32 128, 128
      %287 = vsyncadd [#allocation6], %s286
      %s289 = sshll.u32 [#allocation7], 4
      %s290 = int_to_ptr.vmem [resolvable:$true] %s289
      %292 = dma.vmem_to_hbm [thread:$0]  %s290, 128, %s2, [#allocation6]
    $region21: #{tpu_custom_call.1} parent=1 // pred_fallthru
      _
    // Predicated region
    $region22: #{tpu_custom_call.1} parent=1 // pred_check
      _
    $region23: #{tpu_custom_call.1} parent=1 // pred_check_branch
      %294 = sbr.rel (0) target = $region25
    $region24: #{tpu_custom_call.1} parent=1 // pred_region
      %295 = dma.done [#allocation6], 128
    $region25: #{tpu_custom_call.1} parent=1 // pred_fallthru
      _
    %296 = vsyncpa [#allocation5], 1
    %297 = vsyncpa [#allocation6], 1
  %298 = vsyncmov [#allocation3]
  %s299 = vpop.sfrf %298
  %p300 = scmp.eq.s32.totalorder %s299, 0
  %p301 = pneg %p300
  %303 = shalt.err (%p301)

</llo_original>
